<compile_context>
chip_gen: v5e
topology: v5e:2x2
jax: 0.10.0
libtpu: 0.0.40
codegen_flags: <defaults>
</compile_context>

<pallas_src>
import functools

import jax
import jax.numpy as jnp
from jax.experimental import pallas as pl
from jax.experimental.pallas import tpu as pltpu


# ---------------------------------------------------------------------------
# Kernels
# ---------------------------------------------------------------------------
def _linear_kernel_acc(x_ref, w_ref, b_ref, o_ref, acc_ref):
    """General path: f32 VMEM scratch accumulator, cast to o_ref.dtype at end.

    x_ref: (tm, tk)   w_ref: (tk, tn)  [weight pre-transposed at init time]
    b_ref: (1, tn)    o_ref: (tm, tn)  acc_ref: (tm, tn) f32
    """
    k = pl.program_id(2)

    @pl.when(k == 0)
    def _():
        acc_ref[...] = jnp.zeros_like(acc_ref)

    acc_ref[...] += jnp.dot(
        x_ref[...], w_ref[...], preferred_element_type=jnp.float32
    )

    @pl.when(k == pl.num_programs(2) - 1)
    def _():
        o_ref[...] = (acc_ref[...] + b_ref[...].astype(jnp.float32)).astype(
            o_ref.dtype
        )


def _linear_kernel_f32_out(x_ref, w_ref, b_ref, o_ref):
    """f32-output path: accumulate directly into the resident output block.

    Drops the (tm, tn) f32 scratch and the finalize copy (fewer vector stores
    per K step; matters most on v5e's single vst slot).
    """
    k = pl.program_id(2)

    @pl.when(k == 0)
    def _():
        o_ref[...] = jnp.broadcast_to(
            b_ref[...].astype(jnp.float32), o_ref.shape
        )

    o_ref[...] += jnp.dot(
        x_ref[...], w_ref[...], preferred_element_type=jnp.float32
    )


# ---------------------------------------------------------------------------
# Generation-aware tiling
# ---------------------------------------------------------------------------
@functools.lru_cache(maxsize=None)
def _hw_config():
    """Pick tiles from per-core VMEM capacity (v5e/v6e: 128 MiB, v7x: 64 MiB)."""
    vmem_bytes = None
    try:
        vmem_bytes = int(pltpu.get_tpu_info().vmem_capacity_bytes)
    except Exception:
        vmem_bytes = None
    if vmem_bytes is not None and vmem_bytes >= 100 * 1024 * 1024:
        # v5e / v6e: 128 MiB VMEM, single TensorCore per chip.
        return dict(tm=1024, tn=2048, tk=1024,
                    vmem_limit=80 * 1024 * 1024, two_cores=False)
    # v7x (64 MiB VMEM, 2 TensorCores per chip) or unknown -> conservative.
    return dict(tm=512, tn=1024, tk=1024,
                vmem_limit=48 * 1024 * 1024, two_cores=True)


def _pick_mn_tile(dim, target):
    """Output-axis tile: full dim if it fits, else the MXU-aligned target.

    Edge blocks on M/N only produce garbage rows/cols masked at the store.
    """
    return dim if dim <= target else target


# ---------------------------------------------------------------------------
# One-time parameter relayout ("module init", NOT per forward call)
# ---------------------------------------------------------------------------
def prepare_act_linear_params(weight, bias, *, compute_dtype=None, tk=1024):
    """Relayout nn.Linear parameters for the Pallas hot path (do this ONCE).

    * Transposes W from PyTorch's (out_features, in_features) to (K, N) so the
      kernel runs a plain NN contraction (no transposes on the MXU feed path).
    * Zero-pads K up to a multiple of `tk` when K > tk so the reduction axis
      tiles exactly (zeros do not change the matmul).
    * Optionally casts W to a narrower compute dtype (e.g. jnp.bfloat16);
      accumulation stays f32 inside the kernel.
    """
    _, in_features = weight.shape
    w_kn = weight.T                                   # (K, N)
    if in_features > tk:
        k_pad = (-in_features) % tk
        if k_pad:
            w_kn = jnp.pad(w_kn, ((0, k_pad), (0, 0)))
    if compute_dtype is not None:
        w_kn = w_kn.astype(compute_dtype)
    return w_kn, bias


# ---------------------------------------------------------------------------
# Forward
# ---------------------------------------------------------------------------
@functools.partial(jax.jit, static_argnames=("tm", "tn", "tk"))
def act_linear_forward(x, weight_kn, bias, *, tm=None, tn=None, tk=None):
    """ActLinear.forward.

    `weight_kn` is the (K[, padded], N) weight produced by
    prepare_act_linear_params; its dtype is the matmul compute dtype.
    Returns (out, recorded_activations) where recorded_activations mirrors the
    x_.view(-1, x_.shape[-1]) tensor appended to self.activation_norms.
    """
    cfg = _hw_config()
    tm = cfg["tm"] if tm is None else tm
    tn = cfg["tn"] if tn is None else tn
    tk = cfg["tk"] if tk is None else tk

    *lead, in_features = x.shape
    k_w, out_features = weight_kn.shape
    M = 1
    for d in lead:
        M *= d
    N = out_features

    # --- activation recording (record_activation=True, no mask) -------------
    # TODO(synk): boolean `self.mask` indexing (data-dependent gather) and the
    # host-side .cpu() list append have no clean static-shape Pallas
    # equivalent; the unmasked, on-device activations are returned instead.
    recorded = x.reshape(M, in_features)

    # --- base linear: the Pallas hot path ------------------------------------
    out_dtype = x.dtype
    x2d = recorded.astype(weight_kn.dtype)            # compute dtype = W dtype
    if k_w != in_features:                            # K was zero-padded at init
        x2d = jnp.pad(x2d, ((0, 0), (0, k_w - in_features)))
    K = k_w

    b2d = bias.reshape(1, N)

    tm_e = _pick_mn_tile(M, tm)
    tn_e = _pick_mn_tile(N, tn)
    tk_e = K if K <= tk else tk                       # K is a tk multiple if > tk

    gm, gn, gk = pl.cdiv(M, tm_e), pl.cdiv(N, tn_e), pl.cdiv(K, tk_e)

    # v7x has 2 TensorCores: ensure at least one "parallel" axis has >= 2
    # blocks, otherwise the second core idles.
    if cfg["two_cores"] and gm * gn < 2 and M > 8:
        half = ((-(-M // 2) + 7) // 8) * 8            # ceil(M/2) rounded up to 8
        if half < M:
            tm_e = half
            gm = pl.cdiv(M, tm_e)

    # Real HBM traffic: x is re-streamed once per N block, W once per M block.
    cost = pl.CostEstimate(
        flops=2 * M * K * N,
        transcendentals=0,
        bytes_accessed=(
            M * K * jnp.dtype(x2d.dtype).itemsize * gn
            + K * N * jnp.dtype(weight_kn.dtype).itemsize * gm
            + N * jnp.dtype(bias.dtype).itemsize
            + M * N * jnp.dtype(out_dtype).itemsize
        ),
    )

    # NOTE: pipeline_mode=pl.Buffered(3) on x/W is a second-order knob; only
    # consider it if xprof still shows exposed DMA latency on short K sweeps.
    in_specs = [
        pl.BlockSpec((tm_e, tk_e), lambda i, j, k: (i, k)),   # x   (M, K)
        pl.BlockSpec((tk_e, tn_e), lambda i, j, k: (k, j)),   # W   (K, N)
        pl.BlockSpec((1, tn_e), lambda i, j, k: (0, j)),      # bias
    ]
    out_spec = pl.BlockSpec((tm_e, tn_e), lambda i, j, k: (i, j))

    if out_dtype == jnp.float32:
        kernel = _linear_kernel_f32_out
        scratch = []
    else:
        kernel = _linear_kernel_acc
        scratch = [pltpu.VMEM((tm_e, tn_e), jnp.float32)]

    out2d = pl.pallas_call(
        kernel,
        out_shape=jax.ShapeDtypeStruct((M, N), out_dtype),
        grid_spec=pltpu.PrefetchScalarGridSpec(
            num_scalar_prefetch=0,
            grid=(gm, gn, gk),
            in_specs=in_specs,
            out_specs=out_spec,
            scratch_shapes=scratch,
        ),
        compiler_params=pltpu.CompilerParams(
            dimension_semantics=("parallel", "parallel", "arbitrary"),
            vmem_limit_bytes=cfg["vmem_limit"],
        ),
        cost_estimate=cost,
    )(x2d, weight_kn, b2d)

    out = out2d.reshape(*lead, N)
    return out, recorded


if __name__ == "__main__":
    # Small shapes implied by a drop-in nn.Linear: (batch, seq, hidden)
    batch, seq, hidden_in, hidden_out = 2, 8, 32, 32

    key = jax.random.PRNGKey(0)
    kx, kw, kb = jax.random.split(key, 3)

    x = jax.random.normal(kx, (batch, seq, hidden_in), dtype=jnp.float32)
    weight = jax.random.normal(kw, (hidden_out, hidden_in), dtype=jnp.float32) * 0.02
    bias = jax.random.normal(kb, (hidden_out,), dtype=jnp.float32) * 0.01

    ref = x @ weight.T + bias   # same math as torch.nn.functional.linear

    # (a) exact f32 path (f32-output kernel: direct accumulation, no scratch)
    w_kn_f32, b_f32 = prepare_act_linear_params(weight, bias)
    out, recorded = act_linear_forward(x, w_kn_f32, b_f32)
    jax.block_until_ready(out)
    jax.block_until_ready(recorded)
    assert out.shape == (batch, seq, hidden_out)
    assert recorded.shape == (batch * seq, hidden_in)
    assert jnp.allclose(out, ref, atol=1e-5, rtol=1e-5)
    assert jnp.allclose(recorded, x.reshape(-1, hidden_in))

    # (b) bf16 compute (weights cast once at init), f32 accumulate, f32 output
    w_kn_bf16, _ = prepare_act_linear_params(
        weight, bias, compute_dtype=jnp.bfloat16
    )
    out_bf16c, _ = act_linear_forward(x, w_kn_bf16, b_f32)
    jax.block_until_ready(out_bf16c)
    assert out_bf16c.dtype == jnp.float32
    assert jnp.allclose(out_bf16c, ref, atol=5e-2, rtol=5e-2)

    # (c) bf16 activations + weights -> bf16 output (scratch-accumulator kernel)
    x_b = x.astype(jnp.bfloat16)
    w_b, b_b = prepare_act_linear_params(
        weight.astype(jnp.bfloat16), bias.astype(jnp.bfloat16)
    )
    out_b, _ = act_linear_forward(x_b, w_b, b_b)
    jax.block_until_ready(out_b)
    assert out_b.dtype == jnp.bfloat16
    assert jnp.allclose(out_b.astype(jnp.float32), ref, atol=5e-2, rtol=5e-2)

    print("KERNEL_OK")
</pallas_src>

<mosaic_0001>
module attributes {stable_mosaic.version = 11 : i64} {
  func.func @_linear_kernel_f32_out(%arg0: i32, %arg1: i32, %arg2: i32, %arg3: memref<8x32xf32, #tpu.memory_space<vmem>>, %arg4: memref<32x32xf32, #tpu.memory_space<vmem>>, %arg5: memref<1x32xf32, #tpu.memory_space<vmem>>, %arg6: memref<8x32xf32, #tpu.memory_space<vmem>>) attributes {dimension_semantics = [#tpu.dimension_semantics<parallel>, #tpu.dimension_semantics<parallel>, #tpu.dimension_semantics<arbitrary>], iteration_bounds = array<i64: 2, 1, 1>, scalar_prefetch = 0 : i64, scratch_operands = 0 : i64, tpu.core_type = #tpu.core_type<tc>, window_params = [{transform_indices = @transform_0, window_bounds = array<i64: 8, 32>}, {transform_indices = @transform_1, window_bounds = array<i64: 32, 32>}, {transform_indices = @transform_2, window_bounds = array<i64: 1, 32>}, {transform_indices = @transform_3, window_bounds = array<i64: 8, 32>}]} {
    %c0_i32 = arith.constant 0 : i32
    %0 = arith.cmpi eq, %arg2, %c0_i32 : i32
    %1 = arith.extui %0 : i1 to i32
    %c0_i32_0 = arith.constant 0 : i32
    %2 = arith.cmpi ne, %1, %c0_i32_0 : i32
    scf.if %2 {
      %c0_8 = arith.constant 0 : index
      %c0_9 = arith.constant 0 : index
      %9 = vector.load %arg5[%c0_8, %c0_9] : memref<1x32xf32, #tpu.memory_space<vmem>>, vector<1x32xf32>
      %10 = vector.shape_cast %9 : vector<1x32xf32> to vector<1x32xf32>
      %11 = vector.broadcast %10 : vector<1x32xf32> to vector<8x32xf32>
      %c0_10 = arith.constant 0 : index
      %c0_11 = arith.constant 0 : index
      %12 = vector.load %arg6[%c0_10, %c0_11] : memref<8x32xf32, #tpu.memory_space<vmem>>, vector<8x32xf32>
      tpu.vector_store %arg6[%c0_10, %c0_11], %11 {strides = array<i32>} : memref<8x32xf32, #tpu.memory_space<vmem>>, vector<8x32xf32>,
    } else {
    }
    %c0 = arith.constant 0 : index
    %c0_1 = arith.constant 0 : index
    %3 = vector.load %arg6[%c0, %c0_1] : memref<8x32xf32, #tpu.memory_space<vmem>>, vector<8x32xf32>
    %c0_2 = arith.constant 0 : index
    %c0_3 = arith.constant 0 : index
    %4 = vector.load %arg3[%c0_2, %c0_3] : memref<8x32xf32, #tpu.memory_space<vmem>>, vector<8x32xf32>
    %c0_4 = arith.constant 0 : index
    %c0_5 = arith.constant 0 : index
    %5 = vector.load %arg4[%c0_4, %c0_5] : memref<32x32xf32, #tpu.memory_space<vmem>>, vector<32x32xf32>
    %cst = arith.constant dense<0.000000e+00> : vector<8x32xf32>
    %6 = tpu.matmul %4, %5, %cst {dimension_numbers = #tpu.dot_dimension_numbers<[1], [0], [0], [1], [0, 0, 1, 1], [], []>} : vector<8x32xf32>, vector<32x32xf32>, vector<8x32xf32> -> vector<8x32xf32>
    %7 = arith.addf %3, %6 : vector<8x32xf32>
    %c0_6 = arith.constant 0 : index
    %c0_7 = arith.constant 0 : index
    %8 = vector.load %arg6[%c0_6, %c0_7] : memref<8x32xf32, #tpu.memory_space<vmem>>, vector<8x32xf32>
    tpu.vector_store %arg6[%c0_6, %c0_7], %7 {strides = array<i32>} : memref<8x32xf32, #tpu.memory_space<vmem>>, vector<8x32xf32>,
    return
  }
  func.func @transform_0(%arg0: i32, %arg1: i32, %arg2: i32) -> (i32, i32) {
    %c0_i32 = arith.constant 0 : i32
    return %arg0, %arg2 : i32, i32
  }
  func.func @transform_1(%arg0: i32, %arg1: i32, %arg2: i32) -> (i32, i32) {
    %c0_i32 = arith.constant 0 : i32
    return %arg2, %arg1 : i32, i32
  }
  func.func @transform_2(%arg0: i32, %arg1: i32, %arg2: i32) -> (i32, i32) {
    %c0_i32 = arith.constant 0 : i32
    %c0_i32_0 = arith.constant 0 : i32
    return %c0_i32, %arg1 : i32, i32
  }
  func.func @transform_3(%arg0: i32, %arg1: i32, %arg2: i32) -> (i32, i32) {
    %c0_i32 = arith.constant 0 : i32
    return %arg0, %arg1 : i32, i32
  }
}

</mosaic_0001>

<llo_original>
// kernel: act_linear_forward.1
$region0: #{act_linear_forward.1}
  #allocation0 [shape = 'u32[]', space=smem, size = 0x4, offset = 0x4, fixed_abs, tag = 'smem constant byte address 0x4 - core index']
  #allocation1 [shape = 'u32[72,128]{1,0:T(1,128)}', space=vmem, size = 0x9000, scoped, tag = 'internal scratch']
  %s0 = inlined_call_operand.hbm [shape: f32[16,32], index: 0, kind: input, shape index: {}]
  %s1 = inlined_call_operand.hbm [shape: f32[32,32], index: 1, kind: input, shape index: {}]
  %s2 = inlined_call_operand.vmem [shape: f32[1,32], index: 2, kind: input, shape index: {}]
  %s3 = inlined_call_operand.hbm [shape: f32[16,32], index: 3, kind: output, shape index: {}]
  %s4 = sld [smem:[#allocation0]]
  $region57: #{act_linear_forward.1} parent=0
    _
  %s6 = ssub.s32 1, %s4
  %s7 = scalar_select 0, %s6, %s4
  $region1: #{act_linear_forward.1} parent=0
    #allocation2 [shape = 'u8[8192]{0}', space=vmem, size = 0x2000, scoped, tag = 'input window, operand 0']
    #allocation3 [shape = 's32[2]{0}', space=sflag, size = 0x8, scoped, tag = 'scoped memory for act_linear_forward.1']
    #allocation4 [shape = 's32[2]{0}', space=sflag, size = 0x8, scoped, tag = 'scoped memory for act_linear_forward.1']
    #allocation5 [shape = 'u8[16384]{0}', space=vmem, size = 0x4000, scoped, tag = 'input window, operand 1, single buffered']
    #allocation6 [shape = 's32[1]{0}', space=sflag, size = 0x4, scoped, tag = 'scoped memory for act_linear_forward.1']
    #allocation7 [shape = 'u8[8192]{0}', space=vmem, size = 0x2000, scoped, tag = 'output window, operand 0']
    %8 = vsyncpa [#allocation3], 0
    %s9 = scalar_lea.sflag [#allocation3], 1
    %10 = vsyncpa %s9, 0
    %11 = vsyncpa [#allocation6], 0
    %12 = vsyncpa [#allocation4], 0
    %s13 = scalar_lea.sflag [#allocation4], 1
    %14 = vsyncpa %s13, 0
    loop: start=0, step=1, limit=4
    $region2: #{act_linear_forward.1} parent=1 // loop_pre_header
      _
    $region3: #{act_linear_forward.1} parent=1 // loop_header
      %s16 = sphi 0, %s20
      %p17 = scmp.ge.s32.totalorder %s16, 4
      %s23 = sphi 0, %s42
      %s24 = sphi 0, %s38
      %s25 = sphi 0, %s34
      %s26 = sphi 0, %s23
      %s27 = sphi 0, %s24
      %s28 = sphi 0, %s25
      %s29 = sphi 0, %s26
      %s30 = sphi 0, %s27
      %s31 = sphi 0, %s28
      %s47 = sphi 0, %s49
      %s50 = sphi 0, %s47
      %s51 = sphi 0, %s50
      %s67 = sphi 0, %s51
      %s75 = sphi 0, %s77
      %s78 = sphi 0, %s75
      %s79 = sphi 0, %s78
      %s95 = sphi 0, %s79
      %s101 = sphi 0, %s103
      %s104 = sphi 0, %s101
      %s105 = sphi 0, %s104
      %s121 = sphi 0, %s105
      %s129 = sphi 0, %s131
      %s132 = sphi 0, %s129
      %s133 = sphi 0, %s132
      %s149 = sphi 0, %s133
    $region4: #{act_linear_forward.1} parent=1 // loop_header_branch
      %19 = sbr.rel (%p17) target = $region8
    $region5: #{act_linear_forward.1} parent=1 // loop_body
      %s21 = ssub.s32 %s16, 1
      %s22 = ssub.s32 %s16, 2
      %s32 = sadd.s32 1, %s25
      %p33 = scmp.ge.s32.totalorder %s32, 1
      %s34 = scalar_select %p33, 0, %s32
      %s35 = sadd.s32 1, %s24
      %s36 = scalar_select %p33, %s35, %s24
      %p37 = scmp.ge.s32.totalorder %s36, 1
      %s38 = scalar_select %p37, 0, %s36
      %s39 = sadd.s32 1, %s23
      %s40 = scalar_select %p37, %s39, %s23
      %p41 = scmp.ge.s32.totalorder %s40, 2
      %s42 = scalar_select %p41, 0, %s40
      %s43 = ssub.s32 %s23, %s42
      %s44 = ssub.s32 %s25, %s34
      %s45 = sor.u32 %s43, %s44
      %p46 = scmp.eq.s32.totalorder %s45, 0
      %s48 = sadd.s32 %s47, 1
      %s49 = scalar_select %p46, %s47, %s48
      %p52 = pneg %p46
      %p53 = scmp.eq.s32.totalorder %s16, 1
      %p54 = por %p52, %p53
      %p55 = scmp.ne.s32.totalorder %s47, %s50
      %p56 = scmp.eq.s32.totalorder %s16, 0
      %p57 = por %p55, %p56
      %p58 = scmp.ne.s32.totalorder %s47, %s50
      %p59 = scmp.eq.s32.totalorder %s21, 1
      %p60 = por %p58, %p59
      %p61 = scmp.ne.s32.totalorder %s50, %s51
      %p62 = scmp.eq.s32.totalorder %s21, 0
      %p63 = por %p61, %p62
      %p64 = scmp.ne.s32.totalorder %s50, %s51
      %p65 = scmp.eq.s32.totalorder %s22, 1
      %p66 = por %p64, %p65
      %p68 = scmp.ne.s32.totalorder %s51, %s67
      %p69 = scmp.eq.s32.totalorder %s22, 0
      %p70 = por %p68, %p69
      %s71 = ssub.s32 %s25, %s34
      %s72 = ssub.s32 %s24, %s38
      %s73 = sor.u32 %s71, %s72
      %p74 = scmp.eq.s32.totalorder %s73, 0
      %s76 = sadd.s32 %s75, 1
      %s77 = scalar_select %p74, %s75, %s76
      %p80 = pneg %p74
      %p81 = scmp.eq.s32.totalorder %s16, 1
      %p82 = por %p80, %p81
      %p83 = scmp.ne.s32.totalorder %s75, %s78
      %p84 = scmp.eq.s32.totalorder %s16, 0
      %p85 = por %p83, %p84
      %p86 = scmp.ne.s32.totalorder %s75, %s78
      %p87 = scmp.eq.s32.totalorder %s21, 1
      %p88 = por %p86, %p87
      %p89 = scmp.ne.s32.totalorder %s78, %s79
      %p90 = scmp.eq.s32.totalorder %s21, 0
      %p91 = por %p89, %p90
      %p92 = scmp.ne.s32.totalorder %s78, %s79
      %p93 = scmp.eq.s32.totalorder %s22, 1
      %p94 = por %p92, %p93
      %p96 = scmp.ne.s32.totalorder %s79, %s95
      %p97 = scmp.eq.s32.totalorder %s22, 0
      %p98 = por %p96, %p97
      %s99 = ssub.s32 %s24, %s38
      %p100 = scmp.eq.s32.totalorder %s99, 0
      %s102 = sadd.s32 %s101, 1
      %s103 = scalar_select %p100, %s101, %s102
      %p106 = pneg %p100
      %p107 = scmp.eq.s32.totalorder %s16, 1
      %p108 = por %p106, %p107
      %p109 = scmp.ne.s32.totalorder %s101, %s104
      %p110 = scmp.eq.s32.totalorder %s16, 0
      %p111 = por %p109, %p110
      %p112 = scmp.ne.s32.totalorder %s101, %s104
      %p113 = scmp.eq.s32.totalorder %s21, 1
      %p114 = por %p112, %p113
      %p115 = scmp.ne.s32.totalorder %s104, %s105
      %p116 = scmp.eq.s32.totalorder %s21, 0
      %p117 = por %p115, %p116
      %p118 = scmp.ne.s32.totalorder %s104, %s105
      %p119 = scmp.eq.s32.totalorder %s22, 1
      %p120 = por %p118, %p119
      %p122 = scmp.ne.s32.totalorder %s105, %s121
      %p123 = scmp.eq.s32.totalorder %s22, 0
      %p124 = por %p122, %p123
      %s125 = ssub.s32 %s23, %s42
      %s126 = ssub.s32 %s24, %s38
      %s127 = sor.u32 %s125, %s126
      %p128 = scmp.eq.s32.totalorder %s127, 0
      %s130 = sadd.s32 %s129, 1
      %s131 = scalar_select %p128, %s129, %s130
      %p134 = pneg %p128
      %p135 = scmp.eq.s32.totalorder %s16, 1
      %p136 = por %p134, %p135
      %p137 = scmp.ne.s32.totalorder %s129, %s132
      %p138 = scmp.eq.s32.totalorder %s16, 0
      %p139 = por %p137, %p138
      %p140 = scmp.ne.s32.totalorder %s129, %s132
      %p141 = scmp.eq.s32.totalorder %s21, 1
      %p142 = por %p140, %p141
      %p143 = scmp.ne.s32.totalorder %s132, %s133
      %p144 = scmp.eq.s32.totalorder %s21, 0
      %p145 = por %p143, %p144
      %p146 = scmp.ne.s32.totalorder %s132, %s133
      %p147 = scmp.eq.s32.totalorder %s22, 1
      %p148 = por %p146, %p147
      %p150 = scmp.ne.s32.totalorder %s133, %s149
      %p151 = scmp.eq.s32.totalorder %s22, 0
      %p152 = por %p150, %p151
      %p153 = scmp.le.s32.totalorder 1, %s16
      %p154 = scmp.lt.s32.totalorder %s16, 3
      %p155 = pnand %p153, %p154
      %p156 = pneg %p155
      // Predicated region
      $region9: #{act_linear_forward.1} parent=5 // pred_check
        _
      $region10: #{act_linear_forward.1} parent=5 // pred_check_branch
        %158 = sbr.rel (%p155) target = $region12
      $region11: #{act_linear_forward.1} parent=5 // pred_region
        %s159 = ssub.s32 %s16, 1
        // Predicated region
        $region13: #{act_linear_forward.1} parent=11 // pred_check
          %p160 = pneg %p91
        $region14: #{act_linear_forward.1} parent=11 // pred_check_branch
          %162 = sbr.rel (%p160) target = $region16
        $region15: #{act_linear_forward.1} parent=11 // pred_region
          %s163 = smul.u32 4, %s28
          %165 = vsyncadd [#allocation6], 0
          %s166 = sadd.s32 %s27, %s163
          %s167 = smul.addr %s166, 8
          %s168 = scalar_lea.hbm %s1, %s167
          %s169 = sshll.u32 %s168, 4
          %s170 = int_to_ptr.hbm [resolvable:$true] %s169
          %s171 = sshll.u32 [#allocation5], 4
          %s172 = int_to_ptr.vmem [resolvable:$true] %s171
          %177 = dma.hbm_to_vmem [thread:$0]  %s170, 512, %s172, [#allocation6], 128, 128, 8
        $region16: #{act_linear_forward.1} parent=11 // pred_fallthru
          _
        // Predicated region
        $region17: #{act_linear_forward.1} parent=11 // pred_check
          %p178 = pneg %p117
        $region18: #{act_linear_forward.1} parent=11 // pred_check_branch
          %180 = sbr.rel (%p178) target = $region20
        $region19: #{act_linear_forward.1} parent=11 // pred_region
          %p181 = scmp.lt.s32.totalorder %s27, 0
          %s182 = scalar_select %p181, %s27, 0
          %s183 = scalar_lea.vmem %s2, %s182
        $region20: #{act_linear_forward.1} parent=11 // pred_fallthru
          _
      $region12: #{act_linear_forward.1} parent=5 // pred_fallthru
        _
      %p184 = scmp.lt.s32.totalorder %s16, 2
      // Predicated region
      $region21: #{act_linear_forward.1} parent=5 // pred_check
        %p185 = pneg %p184
      $region22: #{act_linear_forward.1} parent=5 // pred_check_branch
        %187 = sbr.rel (%p185) target = $region24
      $region23: #{act_linear_forward.1} parent=5 // pred_region
        // Predicated region
        $region25: #{act_linear_forward.1} parent=23 // pred_check
          %p188 = pneg %p57
        $region26: #{act_linear_forward.1} parent=23 // pred_check_branch
          %190 = sbr.rel (%p188) target = $region28
        $region27: #{act_linear_forward.1} parent=23 // pred_region
          %s191 = sand.u32 %s47, 1
          %s192 = scalar_lea.sflag [#allocation3], %s191
          %s193 = sand.u32 %s47, 1
          %s194 = smul.addr %s193, 8
          %s195 = scalar_lea.vmem [#allocation2], %s194
          %197 = vsyncadd %s192, 0
          %s198 = sadd.s32 %s25, %s23
          %s199 = smul.addr %s198, 8
          %s200 = scalar_lea.hbm %s0, %s199
          %s202 = sshll.u32 %s200, 4
          %s203 = int_to_ptr.hbm [resolvable:$true] %s202
          %s204 = sshll.u32 %s195, 4
          %s205 = int_to_ptr.vmem [resolvable:$true] %s204
          %207 = dma.hbm_to_vmem [thread:$0]  %s203, 128, %s205, %s192
        $region28: #{act_linear_forward.1} parent=23 // pred_fallthru
          _
      $region24: #{act_linear_forward.1} parent=5 // pred_fallthru
        _
      %p208 = scmp.le.s32.totalorder 1, %s16
      %p209 = scmp.lt.s32.totalorder %s16, 3
      %p210 = pnand %p208, %p209
      %p211 = pneg %p210
      // Predicated region
      $region29: #{act_linear_forward.1} parent=5 // pred_check
        _
      $region30: #{act_linear_forward.1} parent=5 // pred_check_branch
        %213 = sbr.rel (%p210) target = $region32
      $region31: #{act_linear_forward.1} parent=5 // pred_region
        %s214 = ssub.s32 %s16, 1
        %s215 = sand.u32 %s50, 1
        %s216 = scalar_lea.sflag [#allocation3], %s215
        %s217 = sand.u32 %s50, 1
        %s218 = smul.addr %s217, 8
        %s219 = scalar_lea.vmem [#allocation2], %s218
        // Predicated region
        $region33: #{act_linear_forward.1} parent=31 // pred_check
          %p220 = pneg %p63
        $region34: #{act_linear_forward.1} parent=31 // pred_check_branch
          %222 = sbr.rel (%p220) target = $region36
        $region35: #{act_linear_forward.1} parent=31 // pred_region
          %224 = dma.done %s216, 128
        $region36: #{act_linear_forward.1} parent=31 // pred_fallthru
          _
        // Predicated region
        $region37: #{act_linear_forward.1} parent=31 // pred_check
          %p225 = pneg %p91
        $region38: #{act_linear_forward.1} parent=31 // pred_check_branch
          %227 = sbr.rel (%p225) target = $region40
        $region39: #{act_linear_forward.1} parent=31 // pred_region
          %229 = dma.done [#allocation6], 512
        $region40: #{act_linear_forward.1} parent=31 // pred_fallthru
          _
        %s230 = sand.u32 %s50, 1
        %s231 = scalar_lea.sflag [#allocation3], %s230
        %s232 = sand.u32 %s50, 1
        %s233 = smul.addr %s232, 8
        %s234 = scalar_lea.vmem [#allocation2], %s233
        %p235 = pneg %p63
        %p236 = pneg %p60
        %p237 = pneg %p91
        %p238 = pneg %p88
        %p239 = scmp.lt.s32.totalorder %s27, 0
        %s240 = scalar_select %p239, %s27, 0
        %s241 = scalar_lea.vmem %s2, %s240
        %p242 = pneg %p117
        %p243 = pneg %p114
        %p244 = pneg %p145
        %p245 = pneg %p142
        %s246 = sand.u32 %s132, 1
        %s247 = scalar_lea.sflag [#allocation4], %s246
        %s248 = sand.u32 %s132, 1
        %s249 = smul.addr %s248, 8
        %s250 = scalar_lea.vmem [#allocation7], %s249
        %s251 = smul.u32 4, %s28
        %p252 = scmp.lt.s32.totalorder %s27, 0
        %s253 = scalar_select %p252, %s27, 0
        %s254 = scalar_lea.vmem %s2, %s253
        %p255 = scmp.eq.s32.totalorder %s28, 0
        // Predicated region
        $region41: #{act_linear_forward.1} parent=31 // pred_check
          %p256 = pneg %p255
        $region42: #{act_linear_forward.1} parent=31 // pred_check_branch
          %258 = sbr.rel (%p256) target = $region44
        $region43: #{act_linear_forward.1} parent=31 // pred_region
          %v259 = vld [vmem:[%s254] sm:$0x1]
          %v261 = vperm.slane %v259, 0
          %vm263 = vcmask 261120
          %264 = vst.msk [vmem:[%s250] sm:$0xff] %vm263, %v261
        $region44: #{act_linear_forward.1} parent=31 // pred_fallthru
          _
        %v265 = vld [vmem:[%s250] sm:$0xff]
        %v266 = vld [vmem:[%s219] sm:$0xff]
        %v267 = vld [vmem:[#allocation5] sm:$0xff]
        %v268 = vld [vmem:[#allocation5 + $0x8] sm:$0xff]
        %v269 = vld [vmem:[#allocation5 + $0x10] sm:$0xff]
        %v270 = vld [vmem:[#allocation5 + $0x18] sm:$0xff]
        %vm271 = vcmask 261120
        %v273 = vsel %vm271, %v266, 0
        %275 = vmatpush.msra.mxu0 0.0
        %276 = vmatpush.msra.mxu0 0.0
        %277 = vmatpush.msra.mxu0 0.0
        %278 = vmatpush.msra.mxu0 0.0
        %279 = vmatpush.msra.mxu0 0.0
        %280 = vmatpush.msra.mxu0 0.0
        %281 = vmatpush.msra.mxu0 0.0
        %282 = vmatpush.msra.mxu0 0.0
        %283 = vmatpush.msra.mxu0 0.0
        %284 = vmatpush.msra.mxu0 0.0
        %285 = vmatpush.msra.mxu0 0.0
        %286 = vmatpush.msra.mxu0 0.0
        %287 = vmatpush.msra.mxu0 %v270
        %288 = vmatpush.msra.mxu0 %v269
        %289 = vmatpush.msra.mxu0 %v268
        %290 = vmatpush.msra.mxu0 %v267
        %291 = vmatmul.f32.gmra.mxu0 %v273
        %v292 = vpop.f32.mrf.mxu0
        %v293 = vadd.f32 0.0, %v292
        %294 = vdwg.mxu0
        %v295 = vadd.f32 %v265, %v293
        %296 = vst.msk [vmem:[%s250] sm:$0xff] %vm271, %v295
        %s297 = sand.u32 %s132, 1
        %s298 = scalar_lea.sflag [#allocation4], %s297
        %s299 = sand.u32 %s132, 1
        %s300 = smul.addr %s299, 8
        %s301 = scalar_lea.vmem [#allocation7], %s300
        // Predicated region
        $region45: #{act_linear_forward.1} parent=31 // pred_check
          %p302 = pneg %p142
        $region46: #{act_linear_forward.1} parent=31 // pred_check_branch
          %304 = sbr.rel (%p302) target = $region48
        $region47: #{act_linear_forward.1} parent=31 // pred_region
          %306 = vsyncadd %s298, 0
          %s307 = sadd.s32 %s27, %s26
          %s308 = smul.addr %s307, 8
          %s309 = scalar_lea.hbm %s3, %s308
          %s311 = sshll.u32 %s301, 4
          %s312 = int_to_ptr.vmem [resolvable:$true] %s311
          %s313 = sshll.u32 %s309, 4
          %s314 = int_to_ptr.hbm [resolvable:$true] %s313
          %316 = dma.vmem_to_hbm [thread:$0]  %s312, 128, %s314, %s298
        $region48: #{act_linear_forward.1} parent=31 // pred_fallthru
          _
      $region32: #{act_linear_forward.1} parent=5 // pred_fallthru
        _
      %p317 = scmp.le.s32.totalorder 2, %s16
      // Predicated region
      $region49: #{act_linear_forward.1} parent=5 // pred_check
        %p318 = pneg %p317
      $region50: #{act_linear_forward.1} parent=5 // pred_check_branch
        %320 = sbr.rel (%p318) target = $region52
      $region51: #{act_linear_forward.1} parent=5 // pred_region
        %s321 = ssub.s32 %s16, 2
        // Predicated region
        $region53: #{act_linear_forward.1} parent=51 // pred_check
          %p322 = pneg %p148
        $region54: #{act_linear_forward.1} parent=51 // pred_check_branch
          %324 = sbr.rel (%p322) target = $region56
        $region55: #{act_linear_forward.1} parent=51 // pred_region
          %s325 = sand.u32 %s133, 1
          %s326 = scalar_lea.sflag [#allocation4], %s325
          %s327 = sand.u32 %s133, 1
          %s328 = smul.addr %s327, 8
          %s329 = scalar_lea.vmem [#allocation7], %s328
          %331 = dma.done %s326, 128
        $region56: #{act_linear_forward.1} parent=51 // pred_fallthru
          _
      $region52: #{act_linear_forward.1} parent=5 // pred_fallthru
        _
    $region6: #{act_linear_forward.1} parent=1 // loop_footer
      %s20 = sadd.s32 1, %s16
    $region7: #{act_linear_forward.1} parent=1 // loop_footer_branch
      %15 = sbr.rel target = $region3
    $region8: #{act_linear_forward.1} parent=1 // loop_exit
      _
    %332 = vsyncpa [#allocation3], 1
    %s333 = scalar_lea.sflag [#allocation3], 1
    %334 = vsyncpa %s333, 1
    %335 = vsyncpa [#allocation6], 1
    %336 = vsyncpa [#allocation4], 1
    %s337 = scalar_lea.sflag [#allocation4], 1
    %338 = vsyncpa %s337, 1

</llo_original>
